<compile_context>
chip_gen: v7x
topology: tpu7x:2x2x1
jax: 0.10.0
libtpu: 0.0.40
codegen_flags: <defaults>
</compile_context>

<pallas_src>
import functools

import jax
import jax.numpy as jnp
from jax.experimental import pallas as pl
from jax.experimental.pallas import tpu as pltpu


# ---------------------------------------------------------------------------
# Kernel 1: row-wise L2 normalization of the [size, dim] bank
# ---------------------------------------------------------------------------
def _normalize_kernel(size, tile, x_ref, o_ref):
    x = x_ref[...].astype(jnp.float32)                        # (tile, dim)
    sumsq = jnp.sum(x * x, axis=1, keepdims=True)             # XLU reduce
    # 1/max(||x||, 1e-12) == rsqrt(max(||x||^2, 1e-24)); rsqrt runs on the EUP.
    inv = jax.lax.rsqrt(jnp.maximum(sumsq, 1e-24))
    y = x * inv
    if size % tile != 0:
        # Padded last block: rows are independent so pad garbage never leaks
        # into valid rows; just keep the (discarded) pad output finite.
        row = pl.program_id(0) * tile + jax.lax.broadcasted_iota(
            jnp.int32, x.shape, 0)
        y = jnp.where(row < size, y, 0.0)
    o_ref[...] = y.astype(o_ref.dtype)


def _choose_row_tile(size, dim, cap_bytes=4 << 20):
    """Rows per block: multiple of 8 sublanes, block <= cap_bytes, and prefer a
    grid of >= 2 steps so the 'parallel' axis can feed both TensorCores (v7x
    megacore).  Falls back to a full-extent block for tiny / odd-sized banks."""
    bytes_per_row = 4 * max(dim, 1)
    max_rows = max(8, ((cap_bytes // bytes_per_row) // 8) * 8)
    if size <= max_rows:
        if size >= 16 and size % 16 == 0:
            return size // 2                  # grid of 2 -> both cores busy
        return size                           # single full-extent block
    t = max_rows
    while t >= 8:
        if size % t == 0:
            return t
        t -= 8
    return max_rows                           # non-divisible: masked last block


def normalize_rows(bank):
    """L2-normalize every row (= every memory-bank slot) of a [size, dim] bank."""
    size, dim = bank.shape
    tile = _choose_row_tile(size, dim)
    grid = pl.cdiv(size, tile)
    kernel = functools.partial(_normalize_kernel, size, tile)
    return pl.pallas_call(
        kernel,
        out_shape=jax.ShapeDtypeStruct((size, dim), bank.dtype),
        grid=(grid,),
        in_specs=[pl.BlockSpec((tile, dim), lambda i: (i, 0))],
        out_specs=pl.BlockSpec((tile, dim), lambda i: (i, 0)),
        compiler_params=pltpu.CompilerParams(
            dimension_semantics=("parallel",),
            vmem_limit_bytes=48 * 1024 * 1024),
    )(bank)


# ---------------------------------------------------------------------------
# Kernel 2: dequeue-and-enqueue — contiguous row-slab, aliased in-place update
# ---------------------------------------------------------------------------
def _enqueue_kernel(ptr_ref, batch_ref, bank_in_ref, bank_out_ref):
    del bank_in_ref                      # aliased with bank_out_ref in HBM
    B = batch_ref.shape[0]
    size = bank_out_ref.shape[0]
    ptr = ptr_ref[0]
    # Rows of the batch that actually land in the bank this step.
    n = jnp.minimum(B, size - ptr)

    @pl.when(n == B)
    def _steady_state():
        # Common case: one dense, contiguous (B, dim) DMA at row offset `ptr`.
        pltpu.sync_copy(batch_ref, bank_out_ref.at[pl.ds(ptr, B), :])

    @pl.when(n < B)
    def _wrap():
        # Rare wrap step (once per pass through the bank): only the first
        # `size - ptr` rows fit — copy them row by row; untouched rows keep
        # their old data via the input/output aliasing.
        @pl.loop(0, n)
        def _(i):
            pltpu.sync_copy(batch_ref.at[pl.ds(i, 1), :],
                            bank_out_ref.at[pl.ds(ptr + i, 1), :])


def dequeue_and_enqueue(batch, bank, bank_ptr):
    """FIFO update: bank[ptr:ptr+n, :] = batch[:n]. Returns (new_bank, new_ptr).

    `bank` is laid out [size, dim] and stays in HBM; the output aliases the
    input so only the touched rows are DMA'd.  Wrap this call (or a larger
    training step) in jax.jit with donate_argnums on `bank` for a truly
    in-place update (see `dequeue_and_enqueue_donated`)."""
    B, dim = batch.shape
    size, bdim = bank.shape
    assert bdim == dim, "feature dim mismatch between batch and bank"

    new_bank = pl.pallas_call(
        _enqueue_kernel,
        out_shape=jax.ShapeDtypeStruct((size, dim), bank.dtype),
        in_specs=[
            pl.BlockSpec(memory_space=pltpu.MemorySpace.SMEM),   # ptr   (1,)
            pl.BlockSpec(memory_space=pltpu.MemorySpace.VMEM),   # batch (B,dim)
            pl.BlockSpec(memory_space=pl.ANY),                   # bank in HBM
        ],
        out_specs=pl.BlockSpec(memory_space=pl.ANY),             # aliased bank
        input_output_aliases={2: 0},                             # bank in->out
    )(bank_ptr, batch, bank)

    # Pointer update is scalar bookkeeping — keep it out of the kernel.
    ptr = bank_ptr[0]
    new_ptr = jnp.where(ptr + B >= size, 0, ptr + B).astype(jnp.int32).reshape(1)
    return new_bank, new_ptr


# Non-donated path (keeps the caller's pre-update bank handle valid) and the
# donated, truly in-place production path.
_dequeue_and_enqueue_jit = jax.jit(dequeue_and_enqueue)
dequeue_and_enqueue_donated = jax.jit(dequeue_and_enqueue, donate_argnums=(1,))


# ---------------------------------------------------------------------------
# Python-side module mirroring the PyTorch MemoryBankModule semantics
# ---------------------------------------------------------------------------
class MemoryBankModule:
    def __init__(self, size: int = 2 ** 16):
        if size < 0:
            raise ValueError(
                f"Illegal memory bank size {size}, must be non-negative.")
        self.size = size
        self.bank = None          # [size, dim] float32 (slots on rows)
        self.bank_ptr = None      # (1,) int32

    def _init_memory_bank(self, dim: int, key) -> None:
        raw = jax.random.normal(key, (self.size, dim), dtype=jnp.float32)
        self.bank = normalize_rows(raw)            # Pallas kernel 1
        self.bank_ptr = jnp.zeros((1,), dtype=jnp.int32)

    def forward(self, output, labels=None, update: bool = False):
        if self.size == 0:
            return output, None
        _, dim = output.shape
        if self.bank is None:
            # Deterministic synthetic init (stands in for torch.randn buffer).
            self._init_memory_bank(dim, jax.random.PRNGKey(1))
        # Pre-update negatives in the PyTorch [dim, size] orientation.  JAX
        # arrays are immutable so no explicit .clone() is needed; inside a jit
        # the transpose fuses into the consumer's dot_general.
        negatives = self.bank.T
        if update:
            # Non-donated so `negatives` stays valid (clone-then-update
            # semantics).  Use dequeue_and_enqueue_donated in fused jits.
            self.bank, self.bank_ptr = _dequeue_and_enqueue_jit(
                output, self.bank, self.bank_ptr)
        return output, negatives


# ---------------------------------------------------------------------------
# Pure-JAX references for sanity checking
# ---------------------------------------------------------------------------
def _ref_normalize_rows(x):
    norm = jnp.sqrt(jnp.sum(x * x, axis=1, keepdims=True))
    return x / jnp.maximum(norm, 1e-12)


def _ref_enqueue_rows(batch, bank, ptr):
    size = bank.shape[0]
    B = batch.shape[0]
    p = int(ptr[0])
    if p + B >= size:
        bank = bank.at[p:, :].set(batch[: size - p])
        new_p = 0
    else:
        bank = bank.at[p:p + B, :].set(batch)
        new_p = p + B
    return bank, jnp.array([new_p], jnp.int32)


if __name__ == "__main__":
    batch_size, dim, bank_size = 8, 32, 128

    output = jax.random.normal(jax.random.PRNGKey(0), (batch_size, dim),
                               dtype=jnp.float32)

    module = MemoryBankModule(size=bank_size)

    # ---- forward #1: initializes + normalizes the bank (Pallas kernel 1) ----
    out0, neg0 = module.forward(output)
    jax.block_until_ready(neg0)

    raw = jax.random.normal(jax.random.PRNGKey(1), (bank_size, dim), jnp.float32)
    ref_rows = _ref_normalize_rows(raw)
    assert neg0.shape == (dim, bank_size)
    assert jnp.allclose(neg0, ref_rows.T, atol=1e-5, rtol=1e-5)
    assert jnp.allclose(module.bank, ref_rows, atol=1e-5, rtol=1e-5)
    assert jnp.allclose(out0, output)

    # ---- forward #2, update=True: steady-state enqueue (Pallas kernel 2) ----
    out1, neg1 = module.forward(output, update=True)
    jax.block_until_ready(module.bank)

    ref_bank, ref_ptr = _ref_enqueue_rows(output, ref_rows,
                                          jnp.zeros((1,), jnp.int32))
    assert jnp.allclose(module.bank, ref_bank)
    assert int(module.bank_ptr[0]) == int(ref_ptr[0]) == batch_size
    assert jnp.allclose(neg1, ref_rows.T)        # forward returns pre-update bank

    # ---- drive the pointer near the end to exercise the wrap branch --------
    module.bank_ptr = jnp.array([bank_size - 3], jnp.int32)
    _ = module.forward(output, update=True)
    jax.block_until_ready(module.bank)
    ref_bank2, ref_ptr2 = _ref_enqueue_rows(
        output, ref_bank, jnp.array([bank_size - 3], jnp.int32))
    assert jnp.allclose(module.bank, ref_bank2)
    assert int(module.bank_ptr[0]) == int(ref_ptr2[0]) == 0

    # ---- donated, truly in-place update path (production) ------------------
    bank_copy = ref_bank2 + 0.0          # fresh buffer we are free to donate
    new_bank, new_ptr = dequeue_and_enqueue_donated(
        output, bank_copy, jnp.zeros((1,), jnp.int32))
    jax.block_until_ready(new_bank)
    ref_bank3, ref_ptr3 = _ref_enqueue_rows(output, ref_bank2,
                                            jnp.zeros((1,), jnp.int32))
    assert jnp.allclose(new_bank, ref_bank3)
    assert int(new_ptr[0]) == int(ref_ptr3[0])

    print("KERNEL_OK")
</pallas_src>

<mosaic_0001>
module attributes {stable_mosaic.version = 11 : i64} {
  func.func @_normalize_kernel(%arg0: i32, %arg1: memref<64x32xf32, #tpu.memory_space<vmem>>, %arg2: memref<64x32xf32, #tpu.memory_space<vmem>>) attributes {dimension_semantics = [#tpu.dimension_semantics<parallel>], iteration_bounds = array<i64: 2>, scalar_prefetch = 0 : i64, scratch_operands = 0 : i64, tpu.core_type = #tpu.core_type<tc>, window_params = [{transform_indices = @transform_0, window_bounds = array<i64: 64, 32>}, {transform_indices = @transform_1, window_bounds = array<i64: 64, 32>}]} {
    %c0 = arith.constant 0 : index
    %c0_0 = arith.constant 0 : index
    %0 = vector.load %arg1[%c0, %c0_0] : memref<64x32xf32, #tpu.memory_space<vmem>>, vector<64x32xf32>
    %1 = arith.mulf %0, %0 : vector<64x32xf32>
    %cst = arith.constant dense<0.000000e+00> : vector<64xf32>
    %2 = vector.multi_reduction <add>, %1, %cst [1] : vector<64x32xf32> to vector<64xf32>
    %3 = vector.shape_cast %2 : vector<64xf32> to vector<64x1xf32>
    %cst_1 = arith.constant 1.000000e-24 : f32
    %4 = vector.broadcast %cst_1 : f32 to vector<64x1xf32>
    %5 = arith.maximumf %3, %4 : vector<64x1xf32>
    %6 = math.rsqrt %5 : vector<64x1xf32>
    %7 = vector.broadcast %6 : vector<64x1xf32> to vector<64x32xf32>
    %8 = arith.mulf %0, %7 : vector<64x32xf32>
    %c0_2 = arith.constant 0 : index
    %c0_3 = arith.constant 0 : index
    %9 = vector.load %arg2[%c0_2, %c0_3] : memref<64x32xf32, #tpu.memory_space<vmem>>, vector<64x32xf32>
    tpu.vector_store %arg2[%c0_2, %c0_3], %8 {strides = array<i32>} : memref<64x32xf32, #tpu.memory_space<vmem>>, vector<64x32xf32>,
    return
  }
  func.func @transform_0(%arg0: i32) -> (i32, i32) {
    %c0_i32 = arith.constant 0 : i32
    %c0_i32_0 = arith.constant 0 : i32
    return %arg0, %c0_i32 : i32, i32
  }
  func.func @transform_1(%arg0: i32) -> (i32, i32) {
    %c0_i32 = arith.constant 0 : i32
    %c0_i32_0 = arith.constant 0 : i32
    return %arg0, %c0_i32 : i32, i32
  }
}

</mosaic_0001>

<llo_original>
// kernel: tpu_custom_call.1
$region0: #{tpu_custom_call.1}
  #allocation0 [shape = 'u32[]', space=smem, size = 0x4, offset = 0x4, fixed_abs, tag = 'smem constant byte address 0x4 - core index']
  #allocation1 [shape = 'u32[144,128]{1,0:T(1,128)}', space=vmem, size = 0x12000, scoped, tag = 'internal scratch']
  %s0 = inlined_call_operand.vmem [shape: f32[128,32], index: 0, kind: input, shape index: {}]
  %s1 = inlined_call_operand.vmem [shape: f32[128,32], index: 1, kind: output, shape index: {}]
  %s2 = sld [smem:[#allocation0]]
  $region37: #{tpu_custom_call.1} parent=0
    _
  %s4 = ssub.s32 1, %s2
  %s5 = scalar_select 0, %s4, %s2
  loop: start=0, step=1, limit=4
  $region2: #{tpu_custom_call.1} parent=0 // loop_pre_header
    _
  $region3: #{tpu_custom_call.1} parent=0 // loop_header
    %s7 = sphi 0, %s11
    %p8 = scmp.ge.s32.totalorder %s7, 4
    %s17 = sphi 0, %s19
    %s20 = sphi 0, %s17
    %s21 = sphi 0, %s20
    %s37 = sphi 0, %s21
    %s43 = sphi 0, %s45
    %s46 = sphi 0, %s43
    %s47 = sphi 0, %s46
    %s63 = sphi 0, %s47
  $region4: #{tpu_custom_call.1} parent=0 // loop_header_branch
    %10 = sbr.rel (%p8) target = $region8
  $region5: #{tpu_custom_call.1} parent=0 // loop_body
    %s12 = ssub.s32 %s7, 1
    %s13 = ssub.s32 %s7, 2
    %s14 = sadd.s32 %s7, 1
    %s15 = ssub.s32 %s7, %s14
    %p16 = scmp.eq.s32.totalorder %s15, 0
    %s18 = sadd.s32 %s17, 1
    %s19 = scalar_select %p16, %s17, %s18
    %p22 = pneg %p16
    %p23 = scmp.eq.s32.totalorder %s7, 1
    %p24 = por %p22, %p23
    %p25 = scmp.ne.s32.totalorder %s17, %s20
    %p26 = scmp.eq.s32.totalorder %s7, 0
    %p27 = por %p25, %p26
    %p28 = scmp.ne.s32.totalorder %s17, %s20
    %p29 = scmp.eq.s32.totalorder %s12, 1
    %p30 = por %p28, %p29
    %p31 = scmp.ne.s32.totalorder %s20, %s21
    %p32 = scmp.eq.s32.totalorder %s12, 0
    %p33 = por %p31, %p32
    %p34 = scmp.ne.s32.totalorder %s20, %s21
    %p35 = scmp.eq.s32.totalorder %s13, 1
    %p36 = por %p34, %p35
    %p38 = scmp.ne.s32.totalorder %s21, %s37
    %p39 = scmp.eq.s32.totalorder %s13, 0
    %p40 = por %p38, %p39
    %s41 = ssub.s32 %s7, %s14
    %p42 = scmp.eq.s32.totalorder %s41, 0
    %s44 = sadd.s32 %s43, 1
    %s45 = scalar_select %p42, %s43, %s44
    %p48 = pneg %p42
    %p49 = scmp.eq.s32.totalorder %s7, 1
    %p50 = por %p48, %p49
    %p51 = scmp.ne.s32.totalorder %s43, %s46
    %p52 = scmp.eq.s32.totalorder %s7, 0
    %p53 = por %p51, %p52
    %p54 = scmp.ne.s32.totalorder %s43, %s46
    %p55 = scmp.eq.s32.totalorder %s12, 1
    %p56 = por %p54, %p55
    %p57 = scmp.ne.s32.totalorder %s46, %s47
    %p58 = scmp.eq.s32.totalorder %s12, 0
    %p59 = por %p57, %p58
    %p60 = scmp.ne.s32.totalorder %s46, %s47
    %p61 = scmp.eq.s32.totalorder %s13, 1
    %p62 = por %p60, %p61
    %p64 = scmp.ne.s32.totalorder %s47, %s63
    %p65 = scmp.eq.s32.totalorder %s13, 0
    %p66 = por %p64, %p65
    %p67 = scmp.le.s32.totalorder 1, %s7
    %p68 = scmp.lt.s32.totalorder %s7, 3
    %p69 = pnand %p67, %p68
    %p70 = pneg %p69
    // Predicated region
    $region9: #{tpu_custom_call.1} parent=5 // pred_check
      _
    $region10: #{tpu_custom_call.1} parent=5 // pred_check_branch
      %72 = sbr.rel (%p69) target = $region12
    $region11: #{tpu_custom_call.1} parent=5 // pred_region
      %s73 = ssub.s32 %s7, 1
    $region12: #{tpu_custom_call.1} parent=5 // pred_fallthru
      _
    %p74 = scmp.lt.s32.totalorder %s7, 2
    // Predicated region
    $region13: #{tpu_custom_call.1} parent=5 // pred_check
      %p75 = pneg %p74
    $region14: #{tpu_custom_call.1} parent=5 // pred_check_branch
      %77 = sbr.rel (%p75) target = $region16
    $region15: #{tpu_custom_call.1} parent=5 // pred_region
      // Predicated region
      $region17: #{tpu_custom_call.1} parent=15 // pred_check
        %p78 = pneg %p27
      $region18: #{tpu_custom_call.1} parent=15 // pred_check_branch
        %80 = sbr.rel (%p78) target = $region20
      $region19: #{tpu_custom_call.1} parent=15 // pred_region
        %s81 = smul.u32 8, %s7
        %p82 = scmp.lt.s32.totalorder %s81, 15
        %s83 = scalar_select %p82, %s81, 15
        %s84 = smul.addr %s83, 8
        %s85 = scalar_lea.vmem %s0, %s84
        %s86 = smul.u32 8, %s7
      $region20: #{tpu_custom_call.1} parent=15 // pred_fallthru
        _
    $region16: #{tpu_custom_call.1} parent=5 // pred_fallthru
      _
    %p87 = scmp.le.s32.totalorder 1, %s7
    %p88 = scmp.lt.s32.totalorder %s7, 3
    %p89 = pnand %p87, %p88
    %p90 = pneg %p89
    // Predicated region
    $region21: #{tpu_custom_call.1} parent=5 // pred_check
      _
    $region22: #{tpu_custom_call.1} parent=5 // pred_check_branch
      %92 = sbr.rel (%p89) target = $region24
    $region23: #{tpu_custom_call.1} parent=5 // pred_region
      %s93 = ssub.s32 %s7, 1
      %s94 = smul.u32 8, %s12
      %p95 = scmp.lt.s32.totalorder %s94, 15
      %s96 = scalar_select %p95, %s94, 15
      %s97 = smul.addr %s96, 8
      %s98 = scalar_lea.vmem %s0, %s97
      %p99 = pneg %p33
      %p100 = pneg %p30
      %p101 = pneg %p59
      %p102 = pneg %p56
      %s103 = smul.u32 8, %s12
      %p104 = scmp.lt.s32.totalorder %s103, 15
      %s105 = scalar_select %p104, %s103, 15
      %s106 = smul.addr %s105, 8
      %s107 = scalar_lea.vmem %s1, %s106
      %s108 = smul.u32 8, %s12
      %p109 = scmp.lt.s32.totalorder %s108, 15
      %s110 = scalar_select %p109, %s108, 15
      %s111 = smul.addr %s110, 8
      %s112 = scalar_lea.vmem %s0, %s111
      %s113 = smul.u32 8, %s12
      %s114 = smul.u32 8, %s12
      %p115 = scmp.lt.s32.totalorder %s114, 15
      %s116 = scalar_select %p115, %s114, 15
      %s117 = smul.addr %s116, 8
      %s118 = scalar_lea.vmem %s1, %s117
      %s119 = smul.u32 8, %s12
      %v120 = vld [vmem:[%s112] sm:$0xff]
      %v121 = vld [vmem:[%s112 + $0x8] sm:$0xff]
      %v122 = vld [vmem:[%s112 + $0x10] sm:$0xff]
      %v123 = vld [vmem:[%s112 + $0x18] sm:$0xff]
      %v124 = vld [vmem:[%s112 + $0x20] sm:$0xff]
      %v125 = vld [vmem:[%s112 + $0x28] sm:$0xff]
      %v126 = vld [vmem:[%s112 + $0x30] sm:$0xff]
      %v127 = vld [vmem:[%s112 + $0x38] sm:$0xff]
      %v128 = vmul.f32 %v120, %v120
      %v129 = vmul.f32 %v121, %v121
      %v130 = vmul.f32 %v122, %v122
      %v131 = vmul.f32 %v123, %v123
      %v132 = vmul.f32 %v124, %v124
      %v133 = vmul.f32 %v125, %v125
      %v134 = vmul.f32 %v126, %v126
      %v135 = vmul.f32 %v127, %v127
      %vm136 = vcmask 261120
      %v137 = vsel %vm136, %v128, 0.0
      %138 = vadd.xlane.f32.xlu0 %v137
      %v139 = vpop.xlane.xlu0 %138
      %v140 = vsel %vm136, %v129, 0.0
      %141 = vadd.xlane.f32.xlu0 %v140
      %v142 = vpop.xlane.xlu0 %141
      %v143 = vsel %vm136, %v130, 0.0
      %144 = vadd.xlane.f32.xlu0 %v143
      %v145 = vpop.xlane.xlu0 %144
      %v146 = vsel %vm136, %v131, 0.0
      %147 = vadd.xlane.f32.xlu0 %v146
      %v148 = vpop.xlane.xlu0 %147
      %v149 = vsel %vm136, %v132, 0.0
      %150 = vadd.xlane.f32.xlu0 %v149
      %v151 = vpop.xlane.xlu0 %150
      %v152 = vsel %vm136, %v133, 0.0
      %153 = vadd.xlane.f32.xlu0 %v152
      %v154 = vpop.xlane.xlu0 %153
      %v155 = vsel %vm136, %v134, 0.0
      %156 = vadd.xlane.f32.xlu0 %v155
      %v157 = vpop.xlane.xlu0 %156
      %v158 = vsel %vm136, %v135, 0.0
      %159 = vadd.xlane.f32.xlu0 %v158
      %v160 = vpop.xlane.xlu0 %159
      %v161 = vmax.f32 %v139, 1e-24
      %v162 = vmax.f32 %v142, 1e-24
      %v163 = vmax.f32 %v145, 1e-24
      %v164 = vmax.f32 %v148, 1e-24
      %v165 = vmax.f32 %v151, 1e-24
      %v166 = vmax.f32 %v154, 1e-24
      %v167 = vmax.f32 %v157, 1e-24
      %v168 = vmax.f32 %v160, 1e-24
      %v169 = vrsqrt.pop %v161
      %v170 = vrsqrt.pop %v162
      %v171 = vrsqrt.pop %v163
      %v172 = vrsqrt.pop %v164
      %v173 = vrsqrt.pop %v165
      %v174 = vrsqrt.pop %v166
      %v175 = vrsqrt.pop %v167
      %v176 = vrsqrt.pop %v168
      %v177 = vmul.f32 %v120, %v169
      %v178 = vmul.f32 %v121, %v170
      %v179 = vmul.f32 %v122, %v171
      %v180 = vmul.f32 %v123, %v172
      %v181 = vmul.f32 %v124, %v173
      %v182 = vmul.f32 %v125, %v174
      %v183 = vmul.f32 %v126, %v175
      %v184 = vmul.f32 %v127, %v176
      %185 = vst.msk [vmem:[%s118] sm:$0xff] %vm136, %v177
      %186 = vst.msk [vmem:[%s118 + $0x8] sm:$0xff] %vm136, %v178
      %187 = vst.msk [vmem:[%s118 + $0x10] sm:$0xff] %vm136, %v179
      %188 = vst.msk [vmem:[%s118 + $0x18] sm:$0xff] %vm136, %v180
      %189 = vst.msk [vmem:[%s118 + $0x20] sm:$0xff] %vm136, %v181
      %190 = vst.msk [vmem:[%s118 + $0x28] sm:$0xff] %vm136, %v182
      %191 = vst.msk [vmem:[%s118 + $0x30] sm:$0xff] %vm136, %v183
      %192 = vst.msk [vmem:[%s118 + $0x38] sm:$0xff] %vm136, %v184
      %s193 = smul.u32 8, %s12
      %p194 = scmp.lt.s32.totalorder %s193, 15
      %s195 = scalar_select %p194, %s193, 15
      %s196 = smul.addr %s195, 8
      %s197 = scalar_lea.vmem %s1, %s196
      // Predicated region
      $region25: #{tpu_custom_call.1} parent=23 // pred_check
        %p198 = pneg %p56
      $region26: #{tpu_custom_call.1} parent=23 // pred_check_branch
        %200 = sbr.rel (%p198) target = $region28
      $region27: #{tpu_custom_call.1} parent=23 // pred_region
        %s201 = smul.u32 8, %s12
      $region28: #{tpu_custom_call.1} parent=23 // pred_fallthru
        _
    $region24: #{tpu_custom_call.1} parent=5 // pred_fallthru
      _
    %p202 = scmp.le.s32.totalorder 2, %s7
    // Predicated region
    $region29: #{tpu_custom_call.1} parent=5 // pred_check
      %p203 = pneg %p202
    $region30: #{tpu_custom_call.1} parent=5 // pred_check_branch
      %205 = sbr.rel (%p203) target = $region32
    $region31: #{tpu_custom_call.1} parent=5 // pred_region
      %s206 = ssub.s32 %s7, 2
      // Predicated region
      $region33: #{tpu_custom_call.1} parent=31 // pred_check
        %p207 = pneg %p62
      $region34: #{tpu_custom_call.1} parent=31 // pred_check_branch
        %209 = sbr.rel (%p207) target = $region36
      $region35: #{tpu_custom_call.1} parent=31 // pred_region
        %s210 = smul.u32 8, %s13
        %p211 = scmp.lt.s32.totalorder %s210, 15
        %s212 = scalar_select %p211, %s210, 15
        %s213 = smul.addr %s212, 8
        %s214 = scalar_lea.vmem %s1, %s213
      $region36: #{tpu_custom_call.1} parent=31 // pred_fallthru
        _
    $region32: #{tpu_custom_call.1} parent=5 // pred_fallthru
      _
  $region6: #{tpu_custom_call.1} parent=0 // loop_footer
    %s11 = sadd.s32 1, %s7
  $region7: #{tpu_custom_call.1} parent=0 // loop_footer_branch
    %6 = sbr.rel target = $region3
  $region8: #{tpu_custom_call.1} parent=0 // loop_exit
    _

</llo_original>
